<compile_context>
chip_gen: v7x
topology: tpu7x:2x2x1
jax: 0.10.0
libtpu: 0.0.40
codegen_flags: <defaults>
</compile_context>

<pallas_src>
import jax
import jax.numpy as jnp
from jax.experimental import pallas as pl
from jax.experimental.pallas import tpu as pltpu


def se_kernel(x_ref, w1_ref, b1_ref, w2_ref, b2_ref, o_ref):
    # x_ref: (Bt, HW, C); weights: w1 (C, Cr), b1 (1, Cr), w2 (Cr, C), b2 (1, C)
    x = x_ref[...].astype(jnp.float32)                       # (Bt, HW, C)
    inv_hw = 1.0 / x_ref.shape[1]

    # --- squeeze: global average pool over spatial dims (sublane reduce) ---
    pooled = jnp.sum(x, axis=1) * inv_hw                     # (Bt, C) f32

    # --- excitation: FC -> ReLU -> FC -> sigmoid, batched over Bt ---
    z = jnp.dot(pooled, w1_ref[...],
                preferred_element_type=jnp.float32) + b1_ref[...]   # (Bt, Cr)
    z = jnp.maximum(z, 0.0)
    s = jnp.dot(z, w2_ref[...],
                preferred_element_type=jnp.float32) + b2_ref[...]   # (Bt, C)
    s = jax.nn.sigmoid(s)

    # --- scale: broadcast per-channel gate over the spatial (sublane) axis ---
    o_ref[...] = (x * s[:, None, :]).astype(o_ref.dtype)


def _choose_bt(B, per_batch_bytes, target_bytes):
    """Largest Bt dividing B whose (Bt, HW, C) slab fits target_bytes, preferring
    configurations with >=2 grid steps (pipelining depth + v7x megacore)."""
    candidates = [bt for bt in range(1, B + 1)
                  if B % bt == 0 and bt * per_batch_bytes <= target_bytes]
    if not candidates:
        return 1
    multi_step = [bt for bt in candidates if B // bt >= 2]
    pool = multi_step if multi_step else candidates
    return max(pool)


def se_layer1(x, w1, b1, w2, b2, *, block_bytes_target=2 << 20):
    """x: (B, C, H, W); w1: (C//r, C); b1: (C//r, 1); w2: (C, C//r); b2: (C, 1)."""
    B, C, H, W = x.shape
    HW = H * W
    Cr = w1.shape[0]

    # NHWC-flattened layout: channels on lanes, spatial on sublanes.
    x_flat = jnp.transpose(x, (0, 2, 3, 1)).reshape(B, HW, C)
    w1t = w1.T.astype(jnp.float32)               # (C, Cr)
    w2t = w2.T.astype(jnp.float32)               # (Cr, C)
    b1r = b1.reshape(1, Cr).astype(jnp.float32)  # (1, Cr)
    b2r = b2.reshape(1, C).astype(jnp.float32)   # (1, C)

    itemsize = x.dtype.itemsize
    per_batch_bytes = HW * C * itemsize
    Bt = _choose_bt(B, per_batch_bytes, block_bytes_target)
    grid = (B // Bt,)

    # Explicit VMEM budget: double-buffered in + out slabs + weights + margin.
    slab_bytes = Bt * per_batch_bytes
    weight_bytes = (C * Cr + Cr + Cr * C + C) * 4
    vmem_limit = int(max(4 * slab_bytes + 4 * weight_bytes + (2 << 20), 8 << 20))
    # TODO(synk): if 4*slab_bytes approaches physical VMEM (64 MiB on v7x), fall
    # back to a two-pass kernel that tiles the HW axis (pool pass -> scale pass).

    out = pl.pallas_call(
        se_kernel,
        out_shape=jax.ShapeDtypeStruct((B, HW, C), x.dtype),
        grid_spec=pltpu.PrefetchScalarGridSpec(
            num_scalar_prefetch=0,
            grid=grid,
            in_specs=[
                pl.BlockSpec((Bt, HW, C), lambda b: (b, 0, 0)),  # x slab
                pl.BlockSpec((C, Cr), lambda b: (0, 0)),         # fc1 weight (full)
                pl.BlockSpec((1, Cr), lambda b: (0, 0)),         # fc1 bias
                pl.BlockSpec((Cr, C), lambda b: (0, 0)),         # fc2 weight (full)
                pl.BlockSpec((1, C), lambda b: (0, 0)),          # fc2 bias
            ],
            out_specs=pl.BlockSpec((Bt, HW, C), lambda b: (b, 0, 0)),
        ),
        input_output_aliases={0: 0},   # output is an in-place rescale of x
        compiler_params=pltpu.CompilerParams(
            dimension_semantics=("parallel",),
            vmem_limit_bytes=vmem_limit,
        ),
    )(x_flat, w1t, b1r, w2t, b2r)

    return out.reshape(B, H, W, C).transpose(0, 3, 1, 2)


def se_layer1_ref(x, w1, b1, w2, b2):
    """Pure-JAX reference matching PyTorch SELayer1 semantics (NCHW)."""
    pooled = x.mean(axis=(2, 3))                       # (B, C)
    z = jnp.maximum(pooled @ w1.T + b1[:, 0], 0.0)     # (B, Cr)
    s = jax.nn.sigmoid(z @ w2.T + b2[:, 0])            # (B, C)
    return x * s[:, :, None, None]


if __name__ == "__main__":
    B, C, H, W = 2, 32, 16, 16
    reduction = 16
    Cr = C // reduction

    key = jax.random.PRNGKey(0)
    kx, k1, k2, k3, k4 = jax.random.split(key, 5)

    x = jax.random.normal(kx, (B, C, H, W), dtype=jnp.float32)

    # PyTorch Conv2d 1x1 weights are (out, in, 1, 1) == plain FC weights (out, in).
    w1 = jax.random.normal(k1, (Cr, C), dtype=jnp.float32) * (1.0 / jnp.sqrt(C))
    b1 = jax.random.normal(k2, (Cr, 1), dtype=jnp.float32) * 0.1
    w2 = jax.random.normal(k3, (C, Cr), dtype=jnp.float32) * (1.0 / jnp.sqrt(Cr))
    b2 = jax.random.normal(k4, (C, 1), dtype=jnp.float32) * 0.1

    out = se_layer1(x, w1, b1, w2, b2)
    out = jax.block_until_ready(out)

    ref = se_layer1_ref(x, w1, b1, w2, b2)
    assert out.shape == (B, C, H, W)
    assert jnp.allclose(out, ref, atol=1e-5, rtol=1e-5), "mismatch vs reference"

    print("KERNEL_OK")
</pallas_src>

<mosaic_0001>
module attributes {stable_mosaic.version = 11 : i64} {
  func.func @se_kernel(%arg0: i32, %arg1: memref<1x256x32xf32, #tpu.memory_space<vmem>>, %arg2: memref<32x2xf32, #tpu.memory_space<vmem>>, %arg3: memref<1x2xf32, #tpu.memory_space<vmem>>, %arg4: memref<2x32xf32, #tpu.memory_space<vmem>>, %arg5: memref<1x32xf32, #tpu.memory_space<vmem>>, %arg6: memref<1x256x32xf32, #tpu.memory_space<vmem>>) attributes {dimension_semantics = [#tpu.dimension_semantics<parallel>], iteration_bounds = array<i64: 2>, scalar_prefetch = 0 : i64, scratch_operands = 0 : i64, tpu.core_type = #tpu.core_type<tc>, window_params = [{transform_indices = @transform_0, window_bounds = array<i64: 1, 256, 32>}, {pipeline_mode = #tpu.pipeline_mode<synchronous>, transform_indices = @transform_1, window_bounds = array<i64: 32, 2>}, {pipeline_mode = #tpu.pipeline_mode<synchronous>, transform_indices = @transform_2, window_bounds = array<i64: 1, 2>}, {pipeline_mode = #tpu.pipeline_mode<synchronous>, transform_indices = @transform_3, window_bounds = array<i64: 2, 32>}, {pipeline_mode = #tpu.pipeline_mode<synchronous>, transform_indices = @transform_4, window_bounds = array<i64: 1, 32>}, {transform_indices = @transform_5, window_bounds = array<i64: 1, 256, 32>}]} {
    %c0 = arith.constant 0 : index
    %c0_0 = arith.constant 0 : index
    %c0_1 = arith.constant 0 : index
    %0 = vector.load %arg1[%c0, %c0_0, %c0_1] : memref<1x256x32xf32, #tpu.memory_space<vmem>>, vector<1x256x32xf32>
    %cst = arith.constant dense<0.000000e+00> : vector<1x32xf32>
    %1 = vector.multi_reduction <add>, %0, %cst [1] : vector<1x256x32xf32> to vector<1x32xf32>
    %cst_2 = arith.constant 3.906250e-03 : f32
    %2 = vector.broadcast %cst_2 : f32 to vector<1x32xf32>
    %3 = arith.mulf %1, %2 : vector<1x32xf32>
    %c0_3 = arith.constant 0 : index
    %c0_4 = arith.constant 0 : index
    %4 = vector.load %arg2[%c0_3, %c0_4] : memref<32x2xf32, #tpu.memory_space<vmem>>, vector<32x2xf32>
    %cst_5 = arith.constant dense<0.000000e+00> : vector<1x2xf32>
    %5 = tpu.matmul %3, %4, %cst_5 {dimension_numbers = #tpu.dot_dimension_numbers<[1], [0], [0], [1], [0, 0, 1, 1], [], []>} : vector<1x32xf32>, vector<32x2xf32>, vector<1x2xf32> -> vector<1x2xf32>
    %c0_6 = arith.constant 0 : index
    %c0_7 = arith.constant 0 : index
    %6 = vector.load %arg3[%c0_6, %c0_7] : memref<1x2xf32, #tpu.memory_space<vmem>>, vector<1x2xf32>
    %7 = arith.addf %5, %6 : vector<1x2xf32>
    %cst_8 = arith.constant 0.000000e+00 : f32
    %8 = vector.broadcast %cst_8 : f32 to vector<1x2xf32>
    %9 = arith.maximumf %7, %8 : vector<1x2xf32>
    %c0_9 = arith.constant 0 : index
    %c0_10 = arith.constant 0 : index
    %10 = vector.load %arg4[%c0_9, %c0_10] : memref<2x32xf32, #tpu.memory_space<vmem>>, vector<2x32xf32>
    %cst_11 = arith.constant dense<0.000000e+00> : vector<1x32xf32>
    %11 = tpu.matmul %9, %10, %cst_11 {dimension_numbers = #tpu.dot_dimension_numbers<[1], [0], [0], [1], [0, 0, 1, 1], [], []>} : vector<1x2xf32>, vector<2x32xf32>, vector<1x32xf32> -> vector<1x32xf32>
    %c0_12 = arith.constant 0 : index
    %c0_13 = arith.constant 0 : index
    %12 = vector.load %arg5[%c0_12, %c0_13] : memref<1x32xf32, #tpu.memory_space<vmem>>, vector<1x32xf32>
    %13 = arith.addf %11, %12 : vector<1x32xf32>
    %14 = arith.negf %13 : vector<1x32xf32>
    %15 = math.exp %14 : vector<1x32xf32>
    %cst_14 = arith.constant 1.000000e+00 : f32
    %16 = vector.broadcast %cst_14 : f32 to vector<1x32xf32>
    %17 = arith.addf %16, %15 : vector<1x32xf32>
    %18 = arith.divf %16, %17 : vector<1x32xf32>
    %19 = vector.shape_cast %18 : vector<1x32xf32> to vector<1x1x32xf32>
    %20 = vector.broadcast %19 : vector<1x1x32xf32> to vector<1x256x32xf32>
    %21 = arith.mulf %0, %20 : vector<1x256x32xf32>
    %c0_15 = arith.constant 0 : index
    %c0_16 = arith.constant 0 : index
    %c0_17 = arith.constant 0 : index
    %22 = vector.load %arg6[%c0_15, %c0_16, %c0_17] : memref<1x256x32xf32, #tpu.memory_space<vmem>>, vector<1x256x32xf32>
    tpu.vector_store %arg6[%c0_15, %c0_16, %c0_17], %21 {strides = array<i32>} : memref<1x256x32xf32, #tpu.memory_space<vmem>>, vector<1x256x32xf32>,
    return
  }
  func.func @transform_0(%arg0: i32) -> (i32, i32, i32) {
    %c0_i32 = arith.constant 0 : i32
    %c0_i32_0 = arith.constant 0 : i32
    %c0_i32_1 = arith.constant 0 : i32
    return %arg0, %c0_i32, %c0_i32_0 : i32, i32, i32
  }
  func.func @transform_1(%arg0: i32) -> (i32, i32) {
    %c0_i32 = arith.constant 0 : i32
    %c0_i32_0 = arith.constant 0 : i32
    %c0_i32_1 = arith.constant 0 : i32
    return %c0_i32, %c0_i32_0 : i32, i32
  }
  func.func @transform_2(%arg0: i32) -> (i32, i32) {
    %c0_i32 = arith.constant 0 : i32
    %c0_i32_0 = arith.constant 0 : i32
    %c0_i32_1 = arith.constant 0 : i32
    return %c0_i32, %c0_i32_0 : i32, i32
  }
  func.func @transform_3(%arg0: i32) -> (i32, i32) {
    %c0_i32 = arith.constant 0 : i32
    %c0_i32_0 = arith.constant 0 : i32
    %c0_i32_1 = arith.constant 0 : i32
    return %c0_i32, %c0_i32_0 : i32, i32
  }
  func.func @transform_4(%arg0: i32) -> (i32, i32) {
    %c0_i32 = arith.constant 0 : i32
    %c0_i32_0 = arith.constant 0 : i32
    %c0_i32_1 = arith.constant 0 : i32
    return %c0_i32, %c0_i32_0 : i32, i32
  }
  func.func @transform_5(%arg0: i32) -> (i32, i32, i32) {
    %c0_i32 = arith.constant 0 : i32
    %c0_i32_0 = arith.constant 0 : i32
    %c0_i32_1 = arith.constant 0 : i32
    return %arg0, %c0_i32, %c0_i32_0 : i32, i32, i32
  }
}

</mosaic_0001>

<llo_original>
// kernel: tpu_custom_call.1
$region0: #{tpu_custom_call.1}
  #allocation0 [shape = 'u32[]', space=smem, size = 0x4, offset = 0x4, fixed_abs, tag = 'smem constant byte address 0x4 - core index']
  #allocation1 [shape = 'u32[144,128]{1,0:T(1,128)}', space=vmem, size = 0x12000, scoped, tag = 'internal scratch']
  %s0 = inlined_call_operand.vmem [shape: f32[2,256,32], index: 0, kind: input, shape index: {}, may-alias: {0,5}]
  %s1 = inlined_call_operand.vmem [shape: f32[32,2], index: 1, kind: input, shape index: {}]
  %s2 = inlined_call_operand.vmem [shape: f32[1,2], index: 2, kind: input, shape index: {}]
  %s3 = inlined_call_operand.vmem [shape: f32[2,32], index: 3, kind: input, shape index: {}]
  %s4 = inlined_call_operand.vmem [shape: f32[1,32], index: 4, kind: input, shape index: {}]
  %s5 = inlined_call_operand.vmem [shape: f32[2,256,32], index: 5, kind: output, shape index: {}, may-alias: {0,5}]
  %s6 = sld [smem:[#allocation0]]
  $region53: #{tpu_custom_call.1} parent=0
    _
  %s8 = ssub.s32 1, %s6
  %s9 = scalar_select 0, %s8, %s6
  loop: start=0, step=1, limit=4
  $region2: #{tpu_custom_call.1} parent=0 // loop_pre_header
    _
  $region3: #{tpu_custom_call.1} parent=0 // loop_header
    %s11 = sphi 0, %s15
    %p12 = scmp.ge.s32.totalorder %s11, 4
    %s21 = sphi 0, %s23
    %s24 = sphi 0, %s21
    %s25 = sphi 0, %s24
    %s41 = sphi 0, %s25
    %s45 = sphi 0, %s45
    %s47 = sphi 0, %s45
    %s48 = sphi 0, %s47
    %s62 = sphi 0, %s48
    %s66 = sphi 0, %s66
    %s68 = sphi 0, %s66
    %s69 = sphi 0, %s68
    %s83 = sphi 0, %s69
    %s87 = sphi 0, %s87
    %s89 = sphi 0, %s87
    %s90 = sphi 0, %s89
    %s104 = sphi 0, %s90
    %s108 = sphi 0, %s108
    %s110 = sphi 0, %s108
    %s111 = sphi 0, %s110
    %s125 = sphi 0, %s111
    %s131 = sphi 0, %s133
    %s134 = sphi 0, %s131
    %s135 = sphi 0, %s134
    %s151 = sphi 0, %s135
  $region4: #{tpu_custom_call.1} parent=0 // loop_header_branch
    %14 = sbr.rel (%p12) target = $region8
  $region5: #{tpu_custom_call.1} parent=0 // loop_body
    %s16 = ssub.s32 %s11, 1
    %s17 = ssub.s32 %s11, 2
    %s18 = sadd.s32 %s11, 1
    %s19 = ssub.s32 %s11, %s18
    %p20 = scmp.eq.s32.totalorder %s19, 0
    %s22 = sadd.s32 %s21, 1
    %s23 = scalar_select %p20, %s21, %s22
    %p26 = pneg %p20
    %p27 = scmp.eq.s32.totalorder %s11, 1
    %p28 = por %p26, %p27
    %p29 = scmp.ne.s32.totalorder %s21, %s24
    %p30 = scmp.eq.s32.totalorder %s11, 0
    %p31 = por %p29, %p30
    %p32 = scmp.ne.s32.totalorder %s21, %s24
    %p33 = scmp.eq.s32.totalorder %s16, 1
    %p34 = por %p32, %p33
    %p35 = scmp.ne.s32.totalorder %s24, %s25
    %p36 = scmp.eq.s32.totalorder %s16, 0
    %p37 = por %p35, %p36
    %p38 = scmp.ne.s32.totalorder %s24, %s25
    %p39 = scmp.eq.s32.totalorder %s17, 1
    %p40 = por %p38, %p39
    %p42 = scmp.ne.s32.totalorder %s25, %s41
    %p43 = scmp.eq.s32.totalorder %s17, 0
    %p44 = por %p42, %p43
    %s46 = sadd.s32 %s45, 1
    %p49 = scmp.eq.s32.totalorder %s11, 1
    %p50 = scmp.ne.s32.totalorder %s45, %s47
    %p51 = scmp.eq.s32.totalorder %s11, 0
    %p52 = por %p50, %p51
    %p53 = scmp.ne.s32.totalorder %s45, %s47
    %p54 = scmp.eq.s32.totalorder %s16, 1
    %p55 = por %p53, %p54
    %p56 = scmp.ne.s32.totalorder %s47, %s48
    %p57 = scmp.eq.s32.totalorder %s16, 0
    %p58 = por %p56, %p57
    %p59 = scmp.ne.s32.totalorder %s47, %s48
    %p60 = scmp.eq.s32.totalorder %s17, 1
    %p61 = por %p59, %p60
    %p63 = scmp.ne.s32.totalorder %s48, %s62
    %p64 = scmp.eq.s32.totalorder %s17, 0
    %p65 = por %p63, %p64
    %s67 = sadd.s32 %s66, 1
    %p70 = scmp.eq.s32.totalorder %s11, 1
    %p71 = scmp.ne.s32.totalorder %s66, %s68
    %p72 = scmp.eq.s32.totalorder %s11, 0
    %p73 = por %p71, %p72
    %p74 = scmp.ne.s32.totalorder %s66, %s68
    %p75 = scmp.eq.s32.totalorder %s16, 1
    %p76 = por %p74, %p75
    %p77 = scmp.ne.s32.totalorder %s68, %s69
    %p78 = scmp.eq.s32.totalorder %s16, 0
    %p79 = por %p77, %p78
    %p80 = scmp.ne.s32.totalorder %s68, %s69
    %p81 = scmp.eq.s32.totalorder %s17, 1
    %p82 = por %p80, %p81
    %p84 = scmp.ne.s32.totalorder %s69, %s83
    %p85 = scmp.eq.s32.totalorder %s17, 0
    %p86 = por %p84, %p85
    %s88 = sadd.s32 %s87, 1
    %p91 = scmp.eq.s32.totalorder %s11, 1
    %p92 = scmp.ne.s32.totalorder %s87, %s89
    %p93 = scmp.eq.s32.totalorder %s11, 0
    %p94 = por %p92, %p93
    %p95 = scmp.ne.s32.totalorder %s87, %s89
    %p96 = scmp.eq.s32.totalorder %s16, 1
    %p97 = por %p95, %p96
    %p98 = scmp.ne.s32.totalorder %s89, %s90
    %p99 = scmp.eq.s32.totalorder %s16, 0
    %p100 = por %p98, %p99
    %p101 = scmp.ne.s32.totalorder %s89, %s90
    %p102 = scmp.eq.s32.totalorder %s17, 1
    %p103 = por %p101, %p102
    %p105 = scmp.ne.s32.totalorder %s90, %s104
    %p106 = scmp.eq.s32.totalorder %s17, 0
    %p107 = por %p105, %p106
    %s109 = sadd.s32 %s108, 1
    %p112 = scmp.eq.s32.totalorder %s11, 1
    %p113 = scmp.ne.s32.totalorder %s108, %s110
    %p114 = scmp.eq.s32.totalorder %s11, 0
    %p115 = por %p113, %p114
    %p116 = scmp.ne.s32.totalorder %s108, %s110
    %p117 = scmp.eq.s32.totalorder %s16, 1
    %p118 = por %p116, %p117
    %p119 = scmp.ne.s32.totalorder %s110, %s111
    %p120 = scmp.eq.s32.totalorder %s16, 0
    %p121 = por %p119, %p120
    %p122 = scmp.ne.s32.totalorder %s110, %s111
    %p123 = scmp.eq.s32.totalorder %s17, 1
    %p124 = por %p122, %p123
    %p126 = scmp.ne.s32.totalorder %s111, %s125
    %p127 = scmp.eq.s32.totalorder %s17, 0
    %p128 = por %p126, %p127
    %s129 = ssub.s32 %s11, %s18
    %p130 = scmp.eq.s32.totalorder %s129, 0
    %s132 = sadd.s32 %s131, 1
    %s133 = scalar_select %p130, %s131, %s132
    %p136 = pneg %p130
    %p137 = scmp.eq.s32.totalorder %s11, 1
    %p138 = por %p136, %p137
    %p139 = scmp.ne.s32.totalorder %s131, %s134
    %p140 = scmp.eq.s32.totalorder %s11, 0
    %p141 = por %p139, %p140
    %p142 = scmp.ne.s32.totalorder %s131, %s134
    %p143 = scmp.eq.s32.totalorder %s16, 1
    %p144 = por %p142, %p143
    %p145 = scmp.ne.s32.totalorder %s134, %s135
    %p146 = scmp.eq.s32.totalorder %s16, 0
    %p147 = por %p145, %p146
    %p148 = scmp.ne.s32.totalorder %s134, %s135
    %p149 = scmp.eq.s32.totalorder %s17, 1
    %p150 = por %p148, %p149
    %p152 = scmp.ne.s32.totalorder %s135, %s151
    %p153 = scmp.eq.s32.totalorder %s17, 0
    %p154 = por %p152, %p153
    %p155 = scmp.le.s32.totalorder 1, %s11
    %p156 = scmp.lt.s32.totalorder %s11, 3
    %p157 = pnand %p155, %p156
    %p158 = pneg %p157
    // Predicated region
    $region9: #{tpu_custom_call.1} parent=5 // pred_check
      _
    $region10: #{tpu_custom_call.1} parent=5 // pred_check_branch
      %160 = sbr.rel (%p157) target = $region12
    $region11: #{tpu_custom_call.1} parent=5 // pred_region
      %s161 = ssub.s32 %s11, 1
      // Predicated region
      $region13: #{tpu_custom_call.1} parent=11 // pred_check
        %p162 = pneg %p58
      $region14: #{tpu_custom_call.1} parent=11 // pred_check_branch
        %164 = sbr.rel (%p162) target = $region16
      $region15: #{tpu_custom_call.1} parent=11 // pred_region
        _
      $region16: #{tpu_custom_call.1} parent=11 // pred_fallthru
        _
      // Predicated region
      $region17: #{tpu_custom_call.1} parent=11 // pred_check
        %p165 = pneg %p79
      $region18: #{tpu_custom_call.1} parent=11 // pred_check_branch
        %167 = sbr.rel (%p165) target = $region20
      $region19: #{tpu_custom_call.1} parent=11 // pred_region
        _
      $region20: #{tpu_custom_call.1} parent=11 // pred_fallthru
        _
      // Predicated region
      $region21: #{tpu_custom_call.1} parent=11 // pred_check
        %p168 = pneg %p100
      $region22: #{tpu_custom_call.1} parent=11 // pred_check_branch
        %170 = sbr.rel (%p168) target = $region24
      $region23: #{tpu_custom_call.1} parent=11 // pred_region
        _
      $region24: #{tpu_custom_call.1} parent=11 // pred_fallthru
        _
      // Predicated region
      $region25: #{tpu_custom_call.1} parent=11 // pred_check
        %p171 = pneg %p121
      $region26: #{tpu_custom_call.1} parent=11 // pred_check_branch
        %173 = sbr.rel (%p171) target = $region28
      $region27: #{tpu_custom_call.1} parent=11 // pred_region
        _
      $region28: #{tpu_custom_call.1} parent=11 // pred_fallthru
        _
    $region12: #{tpu_custom_call.1} parent=5 // pred_fallthru
      _
    %p174 = scmp.lt.s32.totalorder %s11, 2
    // Predicated region
    $region29: #{tpu_custom_call.1} parent=5 // pred_check
      %p175 = pneg %p174
    $region30: #{tpu_custom_call.1} parent=5 // pred_check_branch
      %177 = sbr.rel (%p175) target = $region32
    $region31: #{tpu_custom_call.1} parent=5 // pred_region
      // Predicated region
      $region33: #{tpu_custom_call.1} parent=31 // pred_check
        %p178 = pneg %p31
      $region34: #{tpu_custom_call.1} parent=31 // pred_check_branch
        %180 = sbr.rel (%p178) target = $region36
      $region35: #{tpu_custom_call.1} parent=31 // pred_region
        %p181 = scmp.lt.s32.totalorder %s11, 1
        %s182 = scalar_select %p181, %s11, 1
        %s183 = smul.addr %s182, 32
        %s184 = smul.addr %s183, 8
        %s185 = scalar_lea.vmem %s0, %s184
      $region36: #{tpu_custom_call.1} parent=31 // pred_fallthru
        _
    $region32: #{tpu_custom_call.1} parent=5 // pred_fallthru
      _
    %p186 = scmp.le.s32.totalorder 1, %s11
    %p187 = scmp.lt.s32.totalorder %s11, 3
    %p188 = pnand %p186, %p187
    %p189 = pneg %p188
    // Predicated region
    $region37: #{tpu_custom_call.1} parent=5 // pred_check
      _
    $region38: #{tpu_custom_call.1} parent=5 // pred_check_branch
      %191 = sbr.rel (%p188) target = $region40
    $region39: #{tpu_custom_call.1} parent=5 // pred_region
      %s192 = ssub.s32 %s11, 1
      %p193 = scmp.lt.s32.totalorder %s16, 1
      %s194 = scalar_select %p193, %s16, 1
      %s195 = smul.addr %s194, 32
      %s196 = smul.addr %s195, 8
      %s197 = scalar_lea.vmem %s0, %s196
      %p198 = pneg %p37
      %p199 = pneg %p34
      %p200 = pneg %p58
      %p201 = pneg %p55
      %p202 = pneg %p79
      %p203 = pneg %p76
      %p204 = pneg %p100
      %p205 = pneg %p97
      %p206 = pneg %p121
      %p207 = pneg %p118
      %p208 = pneg %p147
      %p209 = pneg %p144
      %p210 = scmp.lt.s32.totalorder %s16, 1
      %s211 = scalar_select %p210, %s16, 1
      %s212 = smul.addr %s211, 32
      %s213 = smul.addr %s212, 8
      %s214 = scalar_lea.vmem %s5, %s213
      %p215 = scmp.lt.s32.totalorder %s16, 1
      %s216 = scalar_select %p215, %s16, 1
      %s217 = smul.addr %s216, 32
      %s218 = smul.addr %s217, 8
      %s219 = scalar_lea.vmem %s0, %s218
      %p220 = scmp.lt.s32.totalorder %s16, 1
      %s221 = scalar_select %p220, %s16, 1
      %s222 = smul.addr %s221, 32
      %s223 = smul.addr %s222, 8
      %s224 = scalar_lea.vmem %s5, %s223
      %v225 = vld [vmem:[%s219] sm:$0xff]
      %v226 = vld [vmem:[%s219 + $0x8] sm:$0xff]
      %v227 = vld [vmem:[%s219 + $0x10] sm:$0xff]
      %v228 = vld [vmem:[%s219 + $0x18] sm:$0xff]
      %v229 = vld [vmem:[%s219 + $0x20] sm:$0xff]
      %v230 = vld [vmem:[%s219 + $0x28] sm:$0xff]
      %v231 = vld [vmem:[%s219 + $0x30] sm:$0xff]
      %v232 = vld [vmem:[%s219 + $0x38] sm:$0xff]
      %v233 = vld [vmem:[%s219 + $0x40] sm:$0xff]
      %v234 = vld [vmem:[%s219 + $0x48] sm:$0xff]
      %v235 = vld [vmem:[%s219 + $0x50] sm:$0xff]
      %v236 = vld [vmem:[%s219 + $0x58] sm:$0xff]
      %v237 = vld [vmem:[%s219 + $0x60] sm:$0xff]
      %v238 = vld [vmem:[%s219 + $0x68] sm:$0xff]
      %v239 = vld [vmem:[%s219 + $0x70] sm:$0xff]
      %v240 = vld [vmem:[%s219 + $0x78] sm:$0xff]
      %v241 = vld [vmem:[%s219 + $0x80] sm:$0xff]
      %v242 = vld [vmem:[%s219 + $0x88] sm:$0xff]
      %v243 = vld [vmem:[%s219 + $0x90] sm:$0xff]
      %v244 = vld [vmem:[%s219 + $0x98] sm:$0xff]
      %v245 = vld [vmem:[%s219 + $0xa0] sm:$0xff]
      %v246 = vld [vmem:[%s219 + $0xa8] sm:$0xff]
      %v247 = vld [vmem:[%s219 + $0xb0] sm:$0xff]
      %v248 = vld [vmem:[%s219 + $0xb8] sm:$0xff]
      %v249 = vld [vmem:[%s219 + $0xc0] sm:$0xff]
      %v250 = vld [vmem:[%s219 + $0xc8] sm:$0xff]
      %v251 = vld [vmem:[%s219 + $0xd0] sm:$0xff]
      %v252 = vld [vmem:[%s219 + $0xd8] sm:$0xff]
      %v253 = vld [vmem:[%s219 + $0xe0] sm:$0xff]
      %v254 = vld [vmem:[%s219 + $0xe8] sm:$0xff]
      %v255 = vld [vmem:[%s219 + $0xf0] sm:$0xff]
      %v256 = vld [vmem:[%s219 + $0xf8] sm:$0xff]
      %vm257 = vcmask 261120
      %v258 = vsel %vm257, %v225, 0.0
      %v259 = vsel %vm257, %v226, 0.0
      %v260 = vadd.f32 %v258, %v259
      %v261 = vsel %vm257, %v227, 0.0
      %v262 = vadd.f32 %v260, %v261
      %v263 = vsel %vm257, %v228, 0.0
      %v264 = vadd.f32 %v262, %v263
      %v265 = vsel %vm257, %v229, 0.0
      %v266 = vadd.f32 %v264, %v265
      %v267 = vsel %vm257, %v230, 0.0
      %v268 = vadd.f32 %v266, %v267
      %v269 = vsel %vm257, %v231, 0.0
      %v270 = vadd.f32 %v268, %v269
      %v271 = vsel %vm257, %v232, 0.0
      %v272 = vadd.f32 %v270, %v271
      %v273 = vsel %vm257, %v233, 0.0
      %v274 = vadd.f32 %v272, %v273
      %v275 = vsel %vm257, %v234, 0.0
      %v276 = vadd.f32 %v274, %v275
      %v277 = vsel %vm257, %v235, 0.0
      %v278 = vadd.f32 %v276, %v277
      %v279 = vsel %vm257, %v236, 0.0
      %v280 = vadd.f32 %v278, %v279
      %v281 = vsel %vm257, %v237, 0.0
      %v282 = vadd.f32 %v280, %v281
      %v283 = vsel %vm257, %v238, 0.0
      %v284 = vadd.f32 %v282, %v283
      %v285 = vsel %vm257, %v239, 0.0
      %v286 = vadd.f32 %v284, %v285
      %v287 = vsel %vm257, %v240, 0.0
      %v288 = vadd.f32 %v286, %v287
      %v289 = vsel %vm257, %v241, 0.0
      %v290 = vadd.f32 %v288, %v289
      %v291 = vsel %vm257, %v242, 0.0
      %v292 = vadd.f32 %v290, %v291
      %v293 = vsel %vm257, %v243, 0.0
      %v294 = vadd.f32 %v292, %v293
      %v295 = vsel %vm257, %v244, 0.0
      %v296 = vadd.f32 %v294, %v295
      %v297 = vsel %vm257, %v245, 0.0
      %v298 = vadd.f32 %v296, %v297
      %v299 = vsel %vm257, %v246, 0.0
      %v300 = vadd.f32 %v298, %v299
      %v301 = vsel %vm257, %v247, 0.0
      %v302 = vadd.f32 %v300, %v301
      %v303 = vsel %vm257, %v248, 0.0
      %v304 = vadd.f32 %v302, %v303
      %v305 = vsel %vm257, %v249, 0.0
      %v306 = vadd.f32 %v304, %v305
      %v307 = vsel %vm257, %v250, 0.0
      %v308 = vadd.f32 %v306, %v307
      %v309 = vsel %vm257, %v251, 0.0
      %v310 = vadd.f32 %v308, %v309
      %v311 = vsel %vm257, %v252, 0.0
      %v312 = vadd.f32 %v310, %v311
      %v313 = vsel %vm257, %v253, 0.0
      %v314 = vadd.f32 %v312, %v313
      %v315 = vsel %vm257, %v254, 0.0
      %v316 = vadd.f32 %v314, %v315
      %v317 = vsel %vm257, %v255, 0.0
      %v318 = vadd.f32 %v316, %v317
      %v319 = vsel %vm257, %v256, 0.0
      %v320 = vadd.f32 %v318, %v319
      %v321 = vrot.slane %v320, 4
      %v322 = vadd.f32 %v320, %v321
      %v323 = vrot.slane %v322, 2
      %v324 = vadd.f32 %v322, %v323
      %v325 = vrot.slane %v324, 1
      %v326 = vadd.f32 %v324, %v325
      %v327 = vmul.f32 %v326, 0.00390625
      %v328 = vld [vmem:[%s1] sm:$0xff]
      %v329 = vld [vmem:[%s1 + $0x8] sm:$0xff]
      %v330 = vld [vmem:[%s1 + $0x10] sm:$0xff]
      %v331 = vld [vmem:[%s1 + $0x18] sm:$0xff]
      %v332 = vld [vmem:[%s2] sm:$0x1]
      %v334 = vsel %vm257, %v327, 0
      %336 = vmatprep.subr.mxu0 0.0
      %337 = vmatpush1.msra.mxu0 %v328
      %338 = vmatprep.subr.mxu0 0.0
      %339 = vmatpush1.msra.mxu0 %v329
      %340 = vmatprep.subr.mxu0 0.0
      %341 = vmatpush1.msra.mxu0 %v330
      %342 = vmatprep.subr.mxu0 0.0
      %343 = vmatpush1.msra.mxu0 %v331
      %344 = vmatprep.subr.mxu0 0.0
      %345 = vmatpush1.msra.mxu0 0.0
      %346 = vmatprep.subr.mxu0 0.0
      %347 = vmatpush1.msra.mxu0 0.0
      %348 = vmatprep.subr.mxu0 0.0
      %349 = vmatpush1.msra.mxu0 0.0
      %350 = vmatprep.subr.mxu0 0.0
      %351 = vmatpush1.msra.mxu0 0.0
      %352 = vmatprep.subr.mxu0 0.0
      %353 = vmatpush1.msra.mxu0 0.0
      %354 = vmatprep.subr.mxu0 0.0
      %355 = vmatpush1.msra.mxu0 0.0
      %356 = vmatprep.subr.mxu0 0.0
      %357 = vmatpush1.msra.mxu0 0.0
      %358 = vmatprep.subr.mxu0 0.0
      %359 = vmatpush1.msra.mxu0 0.0
      %360 = vmatprep.subr.mxu0 0.0
      %361 = vmatpush1.msra.mxu0 0.0
      %362 = vmatprep.subr.mxu0 0.0
      %363 = vmatpush1.msra.mxu0 0.0
      %364 = vmatprep.subr.mxu0 0.0
      %365 = vmatpush1.msra.mxu0 0.0
      %366 = vmatprep.subr.mxu0 0.0
      %367 = vmatpush1.msra.mxu0 0.0
      %368 = vmatprep.subr.mxu0 0.0
      %369 = vmatpush1.msra.mxu0 0.0
      %370 = vmatprep.subr.mxu0 0.0
      %371 = vmatpush1.msra.mxu0 0.0
      %372 = vmatprep.subr.mxu0 0.0
      %373 = vmatpush1.msra.mxu0 0.0
      %374 = vmatprep.subr.mxu0 0.0
      %375 = vmatpush1.msra.mxu0 0.0
      %376 = vmatprep.subr.mxu0 0.0
      %377 = vmatpush1.msra.mxu0 0.0
      %378 = vmatprep.subr.mxu0 0.0
      %379 = vmatpush1.msra.mxu0 0.0
      %380 = vmatprep.subr.mxu0 0.0
      %381 = vmatpush1.msra.mxu0 0.0
      %382 = vmatprep.subr.mxu0 0.0
      %383 = vmatpush1.msra.mxu0 0.0
      %384 = vmatprep.subr.mxu0 0.0
      %385 = vmatpush1.msra.mxu0 0.0
      %386 = vmatprep.subr.mxu0 0.0
      %387 = vmatpush1.msra.mxu0 0.0
      %388 = vmatprep.subr.mxu0 0.0
      %389 = vmatpush1.msra.mxu0 0.0
      %390 = vmatprep.subr.mxu0 0.0
      %391 = vmatpush1.msra.mxu0 0.0
      %392 = vmatprep.subr.mxu0 0.0
      %393 = vmatpush1.msra.mxu0 0.0
      %394 = vmatprep.subr.mxu0 0.0
      %395 = vmatpush1.msra.mxu0 0.0
      %396 = vmatprep.subr.mxu0 0.0
      %397 = vmatpush1.msra.mxu0 0.0
      %398 = vmatprep.subr.mxu0 0.0
      %399 = vmatpush1.msra.mxu0 0.0
      %400 = vmatprep.mubr.f32.mxu0 0.0
      %401 = vmatmul.mubr.f32.gmra.mrb[0].mxu0 %v334
      %v402 = vpop.f32.mrb[0].mxu0
      %v403 = vadd.f32 %v332, %v402
      %v404 = vpop.f32.mrb[0].mxu0
      %405 = vdwg.mxu0
      %v406 = vmax.f32 %v403, 0.0
      %v407 = vld [vmem:[%s3] sm:$0x3]
      %v408 = vld [vmem:[%s4] sm:$0x1]
      %vm409 = vcmask 15360
      %v411 = vsel %vm409, %v406, 0
      %vm413 = vcmask 1041408
      %v415 = vsel %vm413, %v407, 0
      %417 = vmatprep.subr.mxu0 0.0
      %418 = vmatpush1.msra.mxu0 %v415
      %419 = vmatprep.subr.mxu0 0.0
      %420 = vmatpush1.msra.mxu0 0.0
      %421 = vmatprep.subr.mxu0 0.0
      %422 = vmatpush1.msra.mxu0 0.0
      %423 = vmatprep.subr.mxu0 0.0
      %424 = vmatpush1.msra.mxu0 0.0
      %425 = vmatprep.subr.mxu0 0.0
      %426 = vmatpush1.msra.mxu0 0.0
      %427 = vmatprep.subr.mxu0 0.0
      %428 = vmatpush1.msra.mxu0 0.0
      %429 = vmatprep.subr.mxu0 0.0
      %430 = vmatpush1.msra.mxu0 0.0
      %431 = vmatprep.subr.mxu0 0.0
      %432 = vmatpush1.msra.mxu0 0.0
      %433 = vmatprep.subr.mxu0 0.0
      %434 = vmatpush1.msra.mxu0 0.0
      %435 = vmatprep.subr.mxu0 0.0
      %436 = vmatpush1.msra.mxu0 0.0
      %437 = vmatprep.subr.mxu0 0.0
      %438 = vmatpush1.msra.mxu0 0.0
      %439 = vmatprep.subr.mxu0 0.0
      %440 = vmatpush1.msra.mxu0 0.0
      %441 = vmatprep.subr.mxu0 0.0
      %442 = vmatpush1.msra.mxu0 0.0
      %443 = vmatprep.subr.mxu0 0.0
      %444 = vmatpush1.msra.mxu0 0.0
      %445 = vmatprep.subr.mxu0 0.0
      %446 = vmatpush1.msra.mxu0 0.0
      %447 = vmatprep.subr.mxu0 0.0
      %448 = vmatpush1.msra.mxu0 0.0
      %449 = vmatprep.subr.mxu0 0.0
      %450 = vmatpush1.msra.mxu0 0.0
      %451 = vmatprep.subr.mxu0 0.0
      %452 = vmatpush1.msra.mxu0 0.0
      %453 = vmatprep.subr.mxu0 0.0
      %454 = vmatpush1.msra.mxu0 0.0
      %455 = vmatprep.subr.mxu0 0.0
      %456 = vmatpush1.msra.mxu0 0.0
      %457 = vmatprep.subr.mxu0 0.0
      %458 = vmatpush1.msra.mxu0 0.0
      %459 = vmatprep.subr.mxu0 0.0
      %460 = vmatpush1.msra.mxu0 0.0
      %461 = vmatprep.subr.mxu0 0.0
      %462 = vmatpush1.msra.mxu0 0.0
      %463 = vmatprep.subr.mxu0 0.0
      %464 = vmatpush1.msra.mxu0 0.0
      %465 = vmatprep.subr.mxu0 0.0
      %466 = vmatpush1.msra.mxu0 0.0
      %467 = vmatprep.subr.mxu0 0.0
      %468 = vmatpush1.msra.mxu0 0.0
      %469 = vmatprep.subr.mxu0 0.0
      %470 = vmatpush1.msra.mxu0 0.0
      %471 = vmatprep.subr.mxu0 0.0
      %472 = vmatpush1.msra.mxu0 0.0
      %473 = vmatprep.subr.mxu0 0.0
      %474 = vmatpush1.msra.mxu0 0.0
      %475 = vmatprep.subr.mxu0 0.0
      %476 = vmatpush1.msra.mxu0 0.0
      %477 = vmatprep.subr.mxu0 0.0
      %478 = vmatpush1.msra.mxu0 0.0
      %479 = vmatprep.subr.mxu0 0.0
      %480 = vmatpush1.msra.mxu0 0.0
      %481 = vmatprep.mubr.f32.mxu0 0.0
      %482 = vmatmul.mubr.f32.gmra.mrb[0].mxu0 %v411
      %v483 = vpop.f32.mrb[0].mxu0
      %v484 = vadd.f32 %v408, %v483
      %v485 = vpop.f32.mrb[0].mxu0
      %486 = vdwg.mxu0
      %v487 = vxor.u32 %v484, 2147483648
      %v488 = vmul.f32 %v487, 1.442695
      %v489 = vpow.pop %v488
      %v490 = vadd.f32 %v489, 1.0
      %v491 = vrcp.pop %v490
      %v492 = vmul.f32 1.0, %v491
      %v493 = vlaneseq
      %v494 = vshrl.u32 %v493, 7
      %v495 = vsub.s32 0, %v494
      %v496 = vrot.slane %v492, %v495
      %v497 = vmul.f32 %v225, %v496
      %v498 = vmul.f32 %v226, %v496
      %v499 = vmul.f32 %v227, %v496
      %v500 = vmul.f32 %v228, %v496
      %v501 = vmul.f32 %v229, %v496
      %v502 = vmul.f32 %v230, %v496
      %v503 = vmul.f32 %v231, %v496
      %v504 = vmul.f32 %v232, %v496
      %v505 = vmul.f32 %v233, %v496
      %v506 = vmul.f32 %v234, %v496
      %v507 = vmul.f32 %v235, %v496
      %v508 = vmul.f32 %v236, %v496
      %v509 = vmul.f32 %v237, %v496
      %v510 = vmul.f32 %v238, %v496
      %v511 = vmul.f32 %v239, %v496
      %v512 = vmul.f32 %v240, %v496
      %v513 = vmul.f32 %v241, %v496
      %v514 = vmul.f32 %v242, %v496
      %v515 = vmul.f32 %v243, %v496
      %v516 = vmul.f32 %v244, %v496
      %v517 = vmul.f32 %v245, %v496
      %v518 = vmul.f32 %v246, %v496
      %v519 = vmul.f32 %v247, %v496
      %v520 = vmul.f32 %v248, %v496
      %v521 = vmul.f32 %v249, %v496
      %v522 = vmul.f32 %v250, %v496
      %v523 = vmul.f32 %v251, %v496
      %v524 = vmul.f32 %v252, %v496
      %v525 = vmul.f32 %v253, %v496
      %v526 = vmul.f32 %v254, %v496
      %v527 = vmul.f32 %v255, %v496
      %v528 = vmul.f32 %v256, %v496
      %529 = vst.msk [vmem:[%s224] sm:$0xff] %vm257, %v497
      %530 = vst.msk [vmem:[%s224 + $0x8] sm:$0xff] %vm257, %v498
      %531 = vst.msk [vmem:[%s224 + $0x10] sm:$0xff] %vm257, %v499
      %532 = vst.msk [vmem:[%s224 + $0x18] sm:$0xff] %vm257, %v500
      %533 = vst.msk [vmem:[%s224 + $0x20] sm:$0xff] %vm257, %v501
      %534 = vst.msk [vmem:[%s224 + $0x28] sm:$0xff] %vm257, %v502
      %535 = vst.msk [vmem:[%s224 + $0x30] sm:$0xff] %vm257, %v503
      %536 = vst.msk [vmem:[%s224 + $0x38] sm:$0xff] %vm257, %v504
      %537 = vst.msk [vmem:[%s224 + $0x40] sm:$0xff] %vm257, %v505
      %538 = vst.msk [vmem:[%s224 + $0x48] sm:$0xff] %vm257, %v506
      %539 = vst.msk [vmem:[%s224 + $0x50] sm:$0xff] %vm257, %v507
      %540 = vst.msk [vmem:[%s224 + $0x58] sm:$0xff] %vm257, %v508
      %541 = vst.msk [vmem:[%s224 + $0x60] sm:$0xff] %vm257, %v509
      %542 = vst.msk [vmem:[%s224 + $0x68] sm:$0xff] %vm257, %v510
      %543 = vst.msk [vmem:[%s224 + $0x70] sm:$0xff] %vm257, %v511
      %544 = vst.msk [vmem:[%s224 + $0x78] sm:$0xff] %vm257, %v512
      %545 = vst.msk [vmem:[%s224 + $0x80] sm:$0xff] %vm257, %v513
      %546 = vst.msk [vmem:[%s224 + $0x88] sm:$0xff] %vm257, %v514
      %547 = vst.msk [vmem:[%s224 + $0x90] sm:$0xff] %vm257, %v515
      %548 = vst.msk [vmem:[%s224 + $0x98] sm:$0xff] %vm257, %v516
      %549 = vst.msk [vmem:[%s224 + $0xa0] sm:$0xff] %vm257, %v517
      %550 = vst.msk [vmem:[%s224 + $0xa8] sm:$0xff] %vm257, %v518
      %551 = vst.msk [vmem:[%s224 + $0xb0] sm:$0xff] %vm257, %v519
      %552 = vst.msk [vmem:[%s224 + $0xb8] sm:$0xff] %vm257, %v520
      %553 = vst.msk [vmem:[%s224 + $0xc0] sm:$0xff] %vm257, %v521
      %554 = vst.msk [vmem:[%s224 + $0xc8] sm:$0xff] %vm257, %v522
      %555 = vst.msk [vmem:[%s224 + $0xd0] sm:$0xff] %vm257, %v523
      %556 = vst.msk [vmem:[%s224 + $0xd8] sm:$0xff] %vm257, %v524
      %557 = vst.msk [vmem:[%s224 + $0xe0] sm:$0xff] %vm257, %v525
      %558 = vst.msk [vmem:[%s224 + $0xe8] sm:$0xff] %vm257, %v526
      %559 = vst.msk [vmem:[%s224 + $0xf0] sm:$0xff] %vm257, %v527
      %560 = vst.msk [vmem:[%s224 + $0xf8] sm:$0xff] %vm257, %v528
      %p561 = scmp.lt.s32.totalorder %s16, 1
      %s562 = scalar_select %p561, %s16, 1
      %s563 = smul.addr %s562, 32
      %s564 = smul.addr %s563, 8
      %s565 = scalar_lea.vmem %s5, %s564
      // Predicated region
      $region41: #{tpu_custom_call.1} parent=39 // pred_check
        %p566 = pneg %p144
      $region42: #{tpu_custom_call.1} parent=39 // pred_check_branch
        %568 = sbr.rel (%p566) target = $region44
      $region43: #{tpu_custom_call.1} parent=39 // pred_region
        _
      $region44: #{tpu_custom_call.1} parent=39 // pred_fallthru
        _
    $region40: #{tpu_custom_call.1} parent=5 // pred_fallthru
      _
    %p569 = scmp.le.s32.totalorder 2, %s11
    // Predicated region
    $region45: #{tpu_custom_call.1} parent=5 // pred_check
      %p570 = pneg %p569
    $region46: #{tpu_custom_call.1} parent=5 // pred_check_branch
      %572 = sbr.rel (%p570) target = $region48
    $region47: #{tpu_custom_call.1} parent=5 // pred_region
      %s573 = ssub.s32 %s11, 2
      // Predicated region
      $region49: #{tpu_custom_call.1} parent=47 // pred_check
        %p574 = pneg %p150
      $region50: #{tpu_custom_call.1} parent=47 // pred_check_branch
        %576 = sbr.rel (%p574) target = $region52
      $region51: #{tpu_custom_call.1} parent=47 // pred_region
        %p577 = scmp.lt.s32.totalorder %s17, 1
        %s578 = scalar_select %p577, %s17, 1
        %s579 = smul.addr %s578, 32
        %s580 = smul.addr %s579, 8
        %s581 = scalar_lea.vmem %s5, %s580
      $region52: #{tpu_custom_call.1} parent=47 // pred_fallthru
        _
    $region48: #{tpu_custom_call.1} parent=5 // pred_fallthru
      _
  $region6: #{tpu_custom_call.1} parent=0 // loop_footer
    %s15 = sadd.s32 1, %s11
  $region7: #{tpu_custom_call.1} parent=0 // loop_footer_branch
    %10 = sbr.rel target = $region3
  $region8: #{tpu_custom_call.1} parent=0 // loop_exit
    _

</llo_original>
